<compile_context>
chip_gen: v7x
topology: tpu7x:2x2x1
jax: 0.10.0
libtpu: 0.0.40
codegen_flags: <defaults>
</compile_context>

<pallas_src>
import functools

import jax
import jax.numpy as jnp
from jax.experimental import pallas as pl
from jax.experimental.pallas import tpu as pltpu


def tce_kernel(logits_ref, labels_ref, out_ref, acc_ref, *, order: int,
               batch: int, tile_b: int):
    i = pl.program_id(0)

    @pl.when(i == 0)
    def _init():
        acc_ref[...] = jnp.zeros_like(acc_ref)

    x = logits_ref[...].astype(jnp.float32)           # (TB, C) f32 math
    tb, c = x.shape
    labels = labels_ref[...]                          # (TB, 1) int32

    # --- target-probability only (no full normalized softmax) ---
    m = jnp.max(x, axis=1, keepdims=True)             # (TB, 1)
    e = jnp.exp(x - m)                                # (TB, C)
    denom = jnp.sum(e, axis=1, keepdims=True)         # (TB, 1)
    col = jax.lax.broadcasted_iota(jnp.int32, (tb, c), 1)
    num = jnp.sum(jnp.where(col == labels, e, 0.0), axis=1, keepdims=True)
    # approx reciprocal runs on the EUP slot (essentially free next to exp)
    p_t = jnp.clip(num * pl.reciprocal(denom, approx=True), 1e-6, 1.0)

    # --- Taylor expansion: sum_{k=1..order} (1 - p_t)^k / k (unrolled) ---
    one_minus = 1.0 - p_t                             # (TB, 1)
    term = one_minus
    loss = one_minus                                  # k = 1
    for k in range(2, order + 1):                     # static -> unrolled
        term = term * one_minus
        loss = loss + term * (1.0 / float(k))         # mul by const, no divide

    # --- mask rows belonging to the padded trailing tile ---
    row = i * tile_b + jax.lax.broadcasted_iota(jnp.int32, (tb, 1), 0)
    loss = jnp.where(row < batch, loss, 0.0)

    acc_ref[...] += jnp.sum(loss, keepdims=True)      # (1, 1) accumulator

    @pl.when(i == pl.num_programs(0) - 1)
    def _finalize():
        out_ref[...] = acc_ref[...] * (1.0 / float(batch))


def tce_loss(logits, labels, *, order=6, block_b=256):
    """logits: [B, C] (any float dtype), labels: [B] int -> scalar f32 loss."""
    B, C = logits.shape
    # Batch tile: either the full batch (always a legal block) or a multiple
    # of 8 sublanes; the trailing partial tile is masked inside the kernel.
    tb = block_b if B > block_b else B
    nt = pl.cdiv(B, tb)
    labels2d = labels.reshape(B, 1).astype(jnp.int32)

    out = pl.pallas_call(
        functools.partial(tce_kernel, order=order, batch=B, tile_b=tb),
        out_shape=jax.ShapeDtypeStruct((1, 1), jnp.float32),
        grid=(nt,),
        in_specs=[
            pl.BlockSpec((tb, C), lambda i: (i, 0)),   # logits tile (native dtype)
            pl.BlockSpec((tb, 1), lambda i: (i, 0)),   # labels tile
        ],
        out_specs=pl.BlockSpec((1, 1), lambda i: (0, 0)),  # resident scalar
        scratch_shapes=[pltpu.VMEM((1, 1), jnp.float32)],
        compiler_params=pltpu.CompilerParams(
            dimension_semantics=("arbitrary",)),       # reduction over batch tiles
    )(logits, labels2d)
    return out[0, 0]


def tce_loss_ref(logits, labels, *, order=6):
    """Plain-JAX reference mirroring the PyTorch forward."""
    p = jax.nn.softmax(logits.astype(jnp.float32), axis=1)
    p = jnp.clip(p, 1e-6, 1.0)
    p_t = p[jnp.arange(logits.shape[0]), labels][:, None]          # (B, 1)
    ks = jnp.arange(1, order + 1, dtype=jnp.float32)[None, :]      # (1, order)
    loss = jnp.sum((1.0 - p_t) ** ks / ks, axis=1)
    return loss.mean()


if __name__ == "__main__":
    num_classes = 10
    order = 6
    batch = 20   # deliberately NOT a multiple of 8 to exercise tile masking

    key = jax.random.PRNGKey(0)
    k_logits, k_labels = jax.random.split(key)
    logits = jax.random.normal(k_logits, (batch, num_classes), dtype=jnp.float32)
    labels = jax.random.randint(k_labels, (batch,), 0, num_classes, dtype=jnp.int32)

    ref = tce_loss_ref(logits, labels, order=order)

    # Tolerance 1e-3: the EUP approx reciprocal limits matching to ~1e-4.
    # 1) single-tile path (B <= block_b)
    loss1 = tce_loss(logits, labels, order=order)
    jax.block_until_ready(loss1)
    assert jnp.allclose(loss1, ref, atol=1e-3, rtol=1e-3), (loss1, ref)

    # 2) gridded path: 3 batch tiles of 8 rows, masked trailing tile
    loss2 = tce_loss(logits, labels, order=order, block_b=8)
    jax.block_until_ready(loss2)
    assert jnp.allclose(loss2, ref, atol=1e-3, rtol=1e-3), (loss2, ref)

    # 3) bf16 logits streamed natively (f32 math inside the kernel)
    logits_bf16 = logits.astype(jnp.bfloat16)
    ref_bf16 = tce_loss_ref(logits_bf16, labels, order=order)
    loss3 = tce_loss(logits_bf16, labels, order=order, block_b=8)
    jax.block_until_ready(loss3)
    assert jnp.allclose(loss3, ref_bf16, atol=1e-3, rtol=1e-3), (loss3, ref_bf16)

    print("KERNEL_OK")
</pallas_src>

<mosaic_0001>
module attributes {stable_mosaic.version = 11 : i64} {
  func.func @tce_kernel(%arg0: i32, %arg1: memref<20x10xf32, #tpu.memory_space<vmem>>, %arg2: memref<20x1xi32, #tpu.memory_space<vmem>>, %arg3: memref<1x1xf32, #tpu.memory_space<vmem>>, %arg4: memref<1x1xf32, #tpu.memory_space<vmem>>) attributes {dimension_semantics = [#tpu.dimension_semantics<arbitrary>], iteration_bounds = array<i64: 1>, scalar_prefetch = 0 : i64, scratch_operands = 1 : i64, tpu.core_type = #tpu.core_type<tc>, window_params = [{transform_indices = @transform_0, window_bounds = array<i64: 20, 10>}, {transform_indices = @transform_1, window_bounds = array<i64: 20, 1>}, {pipeline_mode = #tpu.pipeline_mode<synchronous>, transform_indices = @transform_2, window_bounds = array<i64: 1, 1>}]} {
    %c0_i32 = arith.constant 0 : i32
    %0 = arith.cmpi eq, %arg0, %c0_i32 : i32
    %1 = arith.extui %0 : i1 to i32
    %c0_i32_0 = arith.constant 0 : i32
    %2 = arith.cmpi ne, %1, %c0_i32_0 : i32
    scf.if %2 {
      %cst_24 = arith.constant 0.000000e+00 : f32
      %66 = vector.broadcast %cst_24 : f32 to vector<1x1xf32>
      %c0_25 = arith.constant 0 : index
      %c0_26 = arith.constant 0 : index
      %67 = vector.load %arg4[%c0_25, %c0_26] : memref<1x1xf32, #tpu.memory_space<vmem>>, vector<1x1xf32>
      tpu.vector_store %arg4[%c0_25, %c0_26], %66 {strides = array<i32>} : memref<1x1xf32, #tpu.memory_space<vmem>>, vector<1x1xf32>,
    } else {
    }
    %c0 = arith.constant 0 : index
    %c0_1 = arith.constant 0 : index
    %3 = vector.load %arg1[%c0, %c0_1] : memref<20x10xf32, #tpu.memory_space<vmem>>, vector<20x10xf32>
    %c0_2 = arith.constant 0 : index
    %c0_3 = arith.constant 0 : index
    %4 = vector.load %arg2[%c0_2, %c0_3] : memref<20x1xi32, #tpu.memory_space<vmem>>, vector<20x1xi32>
    %cst = arith.constant dense<0xFF800000> : vector<20xf32>
    %5 = vector.multi_reduction <maximumf>, %3, %cst [1] : vector<20x10xf32> to vector<20xf32>
    %6 = vector.shape_cast %5 : vector<20xf32> to vector<20x1xf32>
    %7 = vector.broadcast %6 : vector<20x1xf32> to vector<20x10xf32>
    %8 = arith.subf %3, %7 : vector<20x10xf32>
    %9 = math.exp %8 : vector<20x10xf32>
    %cst_4 = arith.constant dense<0.000000e+00> : vector<20xf32>
    %10 = vector.multi_reduction <add>, %9, %cst_4 [1] : vector<20x10xf32> to vector<20xf32>
    %11 = vector.shape_cast %10 : vector<20xf32> to vector<20x1xf32>
    %12 = tpu.iota {dimensions = array<i32: 1>} : vector<20x10xi32>
    %13 = vector.broadcast %4 : vector<20x1xi32> to vector<20x10xi32>
    %14 = arith.cmpi eq, %12, %13 : vector<20x10xi32>
    %cst_5 = arith.constant 0.000000e+00 : f32
    %15 = vector.broadcast %cst_5 : f32 to vector<20x10xf32>
    %16 = arith.select %14, %9, %15 : vector<20x10xi1>, vector<20x10xf32>
    %cst_6 = arith.constant dense<0.000000e+00> : vector<20xf32>
    %17 = vector.multi_reduction <add>, %16, %cst_6 [1] : vector<20x10xf32> to vector<20xf32>
    %18 = vector.shape_cast %17 : vector<20xf32> to vector<20x1xf32>
    %19 = tpu.reciprocal %11 {approx = true} : vector<20x1xf32> -> vector<20x1xf32>
    %20 = arith.mulf %18, %19 : vector<20x1xf32>
    %cst_7 = arith.constant 9.99999997E-7 : f32
    %cst_8 = arith.constant 1.000000e+00 : f32
    %21 = vector.broadcast %cst_7 : f32 to vector<20x1xf32>
    %22 = arith.maximumf %21, %20 : vector<20x1xf32>
    %23 = vector.broadcast %cst_8 : f32 to vector<20x1xf32>
    %24 = arith.minimumf %23, %22 : vector<20x1xf32>
    %cst_9 = arith.constant 1.000000e+00 : f32
    %25 = vector.broadcast %cst_9 : f32 to vector<20x1xf32>
    %26 = arith.subf %25, %24 : vector<20x1xf32>
    %27 = arith.mulf %26, %26 : vector<20x1xf32>
    %cst_10 = arith.constant 5.000000e-01 : f32
    %28 = vector.broadcast %cst_10 : f32 to vector<20x1xf32>
    %29 = arith.mulf %27, %28 : vector<20x1xf32>
    %30 = arith.addf %26, %29 : vector<20x1xf32>
    %31 = arith.mulf %27, %26 : vector<20x1xf32>
    %cst_11 = arith.constant 0.333333343 : f32
    %32 = vector.broadcast %cst_11 : f32 to vector<20x1xf32>
    %33 = arith.mulf %31, %32 : vector<20x1xf32>
    %34 = arith.addf %30, %33 : vector<20x1xf32>
    %35 = arith.mulf %31, %26 : vector<20x1xf32>
    %cst_12 = arith.constant 2.500000e-01 : f32
    %36 = vector.broadcast %cst_12 : f32 to vector<20x1xf32>
    %37 = arith.mulf %35, %36 : vector<20x1xf32>
    %38 = arith.addf %34, %37 : vector<20x1xf32>
    %39 = arith.mulf %35, %26 : vector<20x1xf32>
    %cst_13 = arith.constant 2.000000e-01 : f32
    %40 = vector.broadcast %cst_13 : f32 to vector<20x1xf32>
    %41 = arith.mulf %39, %40 : vector<20x1xf32>
    %42 = arith.addf %38, %41 : vector<20x1xf32>
    %43 = arith.mulf %39, %26 : vector<20x1xf32>
    %cst_14 = arith.constant 0.166666672 : f32
    %44 = vector.broadcast %cst_14 : f32 to vector<20x1xf32>
    %45 = arith.mulf %43, %44 : vector<20x1xf32>
    %46 = arith.addf %42, %45 : vector<20x1xf32>
    %c20_i32 = arith.constant 20 : i32
    %47 = arith.muli %arg0, %c20_i32 : i32
    %48 = tpu.iota {dimensions = array<i32: 0>} : vector<20x1xi32>
    %49 = vector.broadcast %47 : i32 to vector<20x1xi32>
    %50 = arith.addi %49, %48 : vector<20x1xi32>
    %c20_i32_15 = arith.constant 20 : i32
    %51 = vector.broadcast %c20_i32_15 : i32 to vector<20x1xi32>
    %52 = arith.cmpi slt, %50, %51 : vector<20x1xi32>
    %cst_16 = arith.constant 0.000000e+00 : f32
    %53 = vector.broadcast %cst_16 : f32 to vector<20x1xf32>
    %54 = arith.select %52, %46, %53 : vector<20x1xi1>, vector<20x1xf32>
    %c0_17 = arith.constant 0 : index
    %c0_18 = arith.constant 0 : index
    %55 = vector.load %arg4[%c0_17, %c0_18] : memref<1x1xf32, #tpu.memory_space<vmem>>, vector<1x1xf32>
    %56 = vector.shape_cast %54 : vector<20x1xf32> to vector<1x20x1xf32>
    %cst_19 = arith.constant dense<0.000000e+00> : vector<1xf32>
    %57 = vector.multi_reduction <add>, %56, %cst_19 [1, 2] : vector<1x20x1xf32> to vector<1xf32>
    %58 = vector.shape_cast %57 : vector<1xf32> to vector<1x1x1xf32>
    %59 = vector.extract %58[0, 0, 0] : f32 from vector<1x1x1xf32>
    %60 = vector.broadcast %59 : f32 to vector<1x1xf32>
    %61 = arith.addf %55, %60 : vector<1x1xf32>
    %c0_20 = arith.constant 0 : index
    %c0_21 = arith.constant 0 : index
    %62 = vector.load %arg4[%c0_20, %c0_21] : memref<1x1xf32, #tpu.memory_space<vmem>>, vector<1x1xf32>
    tpu.vector_store %arg4[%c0_20, %c0_21], %61 {strides = array<i32>} : memref<1x1xf32, #tpu.memory_space<vmem>>, vector<1x1xf32>,
    %c0_i32_22 = arith.constant 0 : i32
    %63 = arith.cmpi eq, %arg0, %c0_i32_22 : i32
    %64 = arith.extui %63 : i1 to i32
    %c0_i32_23 = arith.constant 0 : i32
    %65 = arith.cmpi ne, %64, %c0_i32_23 : i32
    scf.if %65 {
      %c0_24 = arith.constant 0 : index
      %c0_25 = arith.constant 0 : index
      %66 = vector.load %arg4[%c0_24, %c0_25] : memref<1x1xf32, #tpu.memory_space<vmem>>, vector<1x1xf32>
      %cst_26 = arith.constant 5.000000e-02 : f32
      %67 = vector.broadcast %cst_26 : f32 to vector<1x1xf32>
      %68 = arith.mulf %66, %67 : vector<1x1xf32>
      %c0_27 = arith.constant 0 : index
      %c0_28 = arith.constant 0 : index
      %69 = vector.load %arg3[%c0_27, %c0_28] : memref<1x1xf32, #tpu.memory_space<vmem>>, vector<1x1xf32>
      tpu.vector_store %arg3[%c0_27, %c0_28], %68 {strides = array<i32>} : memref<1x1xf32, #tpu.memory_space<vmem>>, vector<1x1xf32>,
    } else {
    }
    return
  }
  func.func @transform_0(%arg0: i32) -> (i32, i32) {
    %c0_i32 = arith.constant 0 : i32
    %c0_i32_0 = arith.constant 0 : i32
    return %arg0, %c0_i32 : i32, i32
  }
  func.func @transform_1(%arg0: i32) -> (i32, i32) {
    %c0_i32 = arith.constant 0 : i32
    %c0_i32_0 = arith.constant 0 : i32
    return %arg0, %c0_i32 : i32, i32
  }
  func.func @transform_2(%arg0: i32) -> (i32, i32) {
    %c0_i32 = arith.constant 0 : i32
    %c0_i32_0 = arith.constant 0 : i32
    %c0_i32_1 = arith.constant 0 : i32
    return %c0_i32, %c0_i32_0 : i32, i32
  }
}

</mosaic_0001>

<llo_original>
// kernel: tpu_custom_call.1
$region0: #{tpu_custom_call.1}
  #allocation0 [shape = 'u32[]', space=smem, size = 0x4, offset = 0x4, fixed_abs, tag = 'smem constant byte address 0x4 - core index']
  #allocation1 [shape = 'u32[144,128]{1,0:T(1,128)}', space=vmem, size = 0x12000, scoped, tag = 'internal scratch']
  #allocation2 [shape = 'f32[1,1]{1,0:T(1,128)}', space=vmem, size = 0x200, scoped, tag = 'scratch operand']
  %s0 = inlined_call_operand.vmem [shape: f32[20,10], index: 0, kind: input, shape index: {}]
  %s1 = inlined_call_operand.vmem [shape: s32[20,1], index: 1, kind: input, shape index: {}]
  %s2 = inlined_call_operand.hbm [shape: f32[1,1], index: 2, kind: output, shape index: {}]
  %s3 = sld [smem:[#allocation0]]
  $region26: #{tpu_custom_call.1} parent=0
    _
  %s5 = ssub.s32 1, %s3
  %s6 = scalar_select 0, %s5, %s3
  $region1: #{tpu_custom_call.1} parent=0
    #allocation3 [shape = 'u8[512]{0}', space=vmem, size = 0x400, scoped, tag = 'output window, operand 0, single buffered']
    #allocation4 [shape = 's32[1]{0}', space=sflag, size = 0x4, scoped, tag = 'scoped memory for tpu_custom_call.1']
    %7 = vsyncpa [#allocation4], 0
    // Predicated region
    $region2: #{tpu_custom_call.1} parent=1 // pred_check
      _
    $region3: #{tpu_custom_call.1} parent=1 // pred_check_branch
      %9 = sbr.rel (0) target = $region5
    $region4: #{tpu_custom_call.1} parent=1 // pred_region
      _
    $region5: #{tpu_custom_call.1} parent=1 // pred_fallthru
      _
    // Predicated region
    $region6: #{tpu_custom_call.1} parent=1 // pred_check
      _
    $region7: #{tpu_custom_call.1} parent=1 // pred_check_branch
      %11 = sbr.rel (0) target = $region9
    $region8: #{tpu_custom_call.1} parent=1 // pred_region
      _
    $region9: #{tpu_custom_call.1} parent=1 // pred_fallthru
      _
    %p12 = scmp.eq.s32.totalorder 0, 0
    // Predicated region
    $region10: #{tpu_custom_call.1} parent=1 // pred_check
      %p13 = pneg %p12
    $region11: #{tpu_custom_call.1} parent=1 // pred_check_branch
      %15 = sbr.rel (%p13) target = $region13
    $region12: #{tpu_custom_call.1} parent=1 // pred_region
      %vm16 = vcmask 0
      %17 = vst.msk [vmem:[#allocation2] sm:$0x1] %vm16, 0.0
    $region13: #{tpu_custom_call.1} parent=1 // pred_fallthru
      _
    %v18 = vld [vmem:[%s0] sm:$0xff]
    %v19 = vld [vmem:[%s0 + $0x8] sm:$0xff]
    %v20 = vld [vmem:[%s0 + $0x10] sm:$0xf]
    %v21 = vld [vmem:[%s1] sm:$0xff]
    %v22 = vld [vmem:[%s1 + $0x8] sm:$0xff]
    %v23 = vld [vmem:[%s1 + $0x10] sm:$0xf]
    %vm24 = vcmask 80896
    %v25 = vsel %vm24, %v18, -inf
    %26 = vmax.xlane.f32.xlu0 %v25
    %v27 = vpop.xlane.xlu0 %26
    %v28 = vsel %vm24, %v19, -inf
    %29 = vmax.xlane.f32.xlu0 %v28
    %v30 = vpop.xlane.xlu0 %29
    %vm31 = vcmask 76800
    %v32 = vsel %vm31, %v20, -inf
    %33 = vmax.xlane.f32.xlu0 %v32
    %v34 = vpop.xlane.xlu0 %33
    %v35 = vsub.f32 %v18, %v27
    %v36 = vsub.f32 %v19, %v30
    %v37 = vsub.f32 %v20, %v34
    %v38 = vmul.f32 %v35, 1.442695
    %v39 = vpow.pop %v38
    %v40 = vmul.f32 %v36, 1.442695
    %v41 = vpow.pop %v40
    %v42 = vmul.f32 %v37, 1.442695
    %v43 = vpow.pop %v42
    %v44 = vsel %vm24, %v39, 0.0
    %45 = vadd.xlane.f32.xlu0 %v44
    %v46 = vpop.xlane.xlu0 %45
    %v47 = vsel %vm24, %v41, 0.0
    %48 = vadd.xlane.f32.xlu0 %v47
    %v49 = vpop.xlane.xlu0 %48
    %v50 = vsel %vm31, %v43, 0.0
    %51 = vadd.xlane.f32.xlu0 %v50
    %v52 = vpop.xlane.xlu0 %51
    %v53 = vlaneseq
    %v54 = vand.u32 %v53, 127
    %55 = vset.pattern.permute.xlu0 0
    %56 = vperm.xlu0 %55, %v21
    %v57 = vpop.permute.xlu0 %56
    %58 = vset.pattern.permute.xlu0 0
    %59 = vperm.xlu0 %58, %v22
    %v60 = vpop.permute.xlu0 %59
    %61 = vset.pattern.permute.xlu0 0
    %62 = vperm.xlu0 %61, %v23
    %v63 = vpop.permute.xlu0 %62
    %vm64 = vcmp.eq.s32.totalorder %v54, %v57
    %vm65 = vcmp.eq.s32.totalorder %v54, %v60
    %vm66 = vcmp.eq.s32.totalorder %v54, %v63
    %v67 = vsel %vm64, %v39, 0.0
    %v68 = vsel %vm65, %v41, 0.0
    %v69 = vsel %vm66, %v43, 0.0
    %v70 = vsel %vm24, %v67, 0.0
    %71 = vadd.xlane.f32.xlu0 %v70
    %v72 = vpop.xlane.xlu0 %71
    %v73 = vsel %vm24, %v68, 0.0
    %74 = vadd.xlane.f32.xlu0 %v73
    %v75 = vpop.xlane.xlu0 %74
    %v76 = vsel %vm31, %v69, 0.0
    %77 = vadd.xlane.f32.xlu0 %v76
    %v78 = vpop.xlane.xlu0 %77
    %v79 = vrcp.pop %v46
    %v80 = vrcp.pop %v49
    %v81 = vrcp.pop %v52
    %v82 = vmul.f32 %v72, %v79
    %v83 = vmul.f32 %v75, %v80
    %v84 = vmul.f32 %v78, %v81
    %v85 = vmax.f32 %v82, 1e-06
    %v86 = vmax.f32 %v83, 1e-06
    %v87 = vmax.f32 %v84, 1e-06
    %v88 = vmin.f32 %v85, 1.0
    %v89 = vmin.f32 %v86, 1.0
    %v90 = vmin.f32 %v87, 1.0
    %v91 = vsub.f32 1.0, %v88
    %v92 = vsub.f32 1.0, %v89
    %v93 = vsub.f32 1.0, %v90
    %v94 = vmul.f32 %v91, %v91
    %v95 = vmul.f32 %v92, %v92
    %v96 = vmul.f32 %v93, %v93
    %v97 = vmul.f32 %v94, 0.5
    %v98 = vmul.f32 %v95, 0.5
    %v99 = vmul.f32 %v96, 0.5
    %v100 = vadd.f32 %v91, %v97
    %v101 = vadd.f32 %v92, %v98
    %v102 = vadd.f32 %v93, %v99
    %v103 = vmul.f32 %v94, %v91
    %v104 = vmul.f32 %v95, %v92
    %v105 = vmul.f32 %v96, %v93
    %v106 = vmul.f32 %v103, 0.33333334
    %v107 = vmul.f32 %v104, 0.33333334
    %v108 = vmul.f32 %v105, 0.33333334
    %v109 = vadd.f32 %v100, %v106
    %v110 = vadd.f32 %v101, %v107
    %v111 = vadd.f32 %v102, %v108
    %v112 = vmul.f32 %v103, %v91
    %v113 = vmul.f32 %v104, %v92
    %v114 = vmul.f32 %v105, %v93
    %v115 = vmul.f32 %v112, 0.25
    %v116 = vmul.f32 %v113, 0.25
    %v117 = vmul.f32 %v114, 0.25
    %v118 = vadd.f32 %v109, %v115
    %v119 = vadd.f32 %v110, %v116
    %v120 = vadd.f32 %v111, %v117
    %v121 = vmul.f32 %v112, %v91
    %v122 = vmul.f32 %v113, %v92
    %v123 = vmul.f32 %v114, %v93
    %v124 = vmul.f32 %v121, 0.2
    %v125 = vmul.f32 %v122, 0.2
    %v126 = vmul.f32 %v123, 0.2
    %v127 = vadd.f32 %v118, %v124
    %v128 = vadd.f32 %v119, %v125
    %v129 = vadd.f32 %v120, %v126
    %v130 = vmul.f32 %v121, %v91
    %v131 = vmul.f32 %v122, %v92
    %v132 = vmul.f32 %v123, %v93
    %v133 = vmul.f32 %v130, 0.16666667
    %v134 = vmul.f32 %v131, 0.16666667
    %v135 = vmul.f32 %v132, 0.16666667
    %v136 = vadd.f32 %v127, %v133
    %v137 = vadd.f32 %v128, %v134
    %v138 = vadd.f32 %v129, %v135
    %s139 = smul.u32 0, 20
    %v140 = vlaneseq
    %v141 = vshrl.u32 %v140, 7
    %v142 = vadd.s32 %v141, 8
    %v143 = vadd.s32 %v141, 16
    %v144 = vstv %s139
    %v145 = vadd.s32 %v144, %v141
    %v146 = vadd.s32 %v144, %v142
    %v147 = vadd.s32 %v144, %v143
    %vm148 = vcmp.lt.s32.totalorder %v145, 20
    %vm149 = vcmp.lt.s32.totalorder %v146, 20
    %vm150 = vcmp.lt.s32.totalorder %v147, 20
    %v151 = vsel %vm148, %v136, 0.0
    %v152 = vsel %vm149, %v137, 0.0
    %v153 = vsel %vm150, %v138, 0.0
    %v154 = vld [vmem:[#allocation2] sm:$0x1]
    %vm155 = vcmask 7168
    %v156 = vsel %vm155, %v151, 0.0
    %v157 = vsel %vm155, %v152, 0.0
    %v158 = vadd.f32 %v156, %v157
    %vm159 = vcmask 3072
    %v160 = vsel %vm159, %v153, 0.0
    %v161 = vadd.f32 %v158, %v160
    %162 = vadd.xlane.f32.xlu0 %v161
    %v163 = vpop.xlane.xlu0 %162
    %v164 = vrot.slane %v163, 4
    %v165 = vadd.f32 %v163, %v164
    %v166 = vrot.slane %v165, 2
    %v167 = vadd.f32 %v165, %v166
    %v168 = vrot.slane %v167, 1
    %v169 = vadd.f32 %v167, %v168
    %s170 = vtos %v169
    %v171 = vstv %s170
    %v172 = vadd.f32 %v154, %v171
    %vm173 = vcmask 0
    %174 = vst.msk [vmem:[#allocation2] sm:$0x1] %vm173, %v172
    // Predicated region
    $region14: #{tpu_custom_call.1} parent=1 // pred_check
      %p175 = pneg %p12
    $region15: #{tpu_custom_call.1} parent=1 // pred_check_branch
      %177 = sbr.rel (%p175) target = $region17
    $region16: #{tpu_custom_call.1} parent=1 // pred_region
      %v178 = vld [vmem:[#allocation2] sm:$0x1]
      %v179 = vmul.f32 %v178, 0.05
      %180 = vst.msk [vmem:[#allocation3] sm:$0x1] %vm173, %v179
    $region17: #{tpu_custom_call.1} parent=1 // pred_fallthru
      _
    // Predicated region
    $region18: #{tpu_custom_call.1} parent=1 // pred_check
      _
    $region19: #{tpu_custom_call.1} parent=1 // pred_check_branch
      %182 = sbr.rel (0) target = $region21
    $region20: #{tpu_custom_call.1} parent=1 // pred_region
      %s184 = ssub.s32 16, 16
      %185 = vsyncadd [#allocation4], %s184
      %s187 = sshll.u32 [#allocation3], 4
      %s188 = int_to_ptr.vmem [resolvable:$true] %s187
      %190 = dma.vmem_to_hbm [thread:$0]  %s188, 16, %s2, [#allocation4]
    $region21: #{tpu_custom_call.1} parent=1 // pred_fallthru
      _
    // Predicated region
    $region22: #{tpu_custom_call.1} parent=1 // pred_check
      _
    $region23: #{tpu_custom_call.1} parent=1 // pred_check_branch
      %192 = sbr.rel (0) target = $region25
    $region24: #{tpu_custom_call.1} parent=1 // pred_region
      %193 = dma.done [#allocation4], 16
    $region25: #{tpu_custom_call.1} parent=1 // pred_fallthru
      _
    %194 = vsyncpa [#allocation4], 1

</llo_original>
